<compile_context>
chip_gen: v5e
topology: v5e:2x2
jax: 0.10.0
libtpu: 0.0.40
codegen_flags: <defaults>
</compile_context>

<pallas_src>
import jax
import jax.numpy as jnp
from jax.experimental import pallas as pl
from jax.experimental.pallas import tpu as pltpu

HID_PAD = 128  # hidden dim 10 padded to one full lane width


def _mlp_kernel(x_ref, w1_ref, b1_ref, w2_ref, b2_ref, o_ref):
    # x_ref:  (TILE_N, D)        flattened input tile
    # w1_ref: (D, 128)           first linear weight, (in, out) layout, zero-padded cols 10..127
    # b1_ref: (1, 128)           first bias, zero-padded
    # w2_ref: (1, 128)           second linear weight as a lane row, zero-padded
    # b2_ref: (1, 1)             second bias
    # o_ref:  (TILE_N, 128)      lane-dense output slab (result broadcast across lanes)
    x = x_ref[...]
    h = jnp.dot(x, w1_ref[...], preferred_element_type=jnp.float32)   # MXU
    h = jnp.maximum(h + b1_ref[...], 0.0)                              # VPU (lane-dense)
    # Second "matmul" as VPU mul + lane reduce: padded lanes are exactly zero.
    y = jnp.sum(h * w2_ref[...], axis=-1, keepdims=True) + b2_ref[...]  # (TILE_N, 1)
    o_ref[...] = jnp.broadcast_to(y, o_ref.shape).astype(o_ref.dtype)


def _round_up(a, b):
    return (a + b - 1) // b * b


def flatten_model_forward(x_nchw, w1, b1, w2, b2):
    """x_nchw: (N, C, H, W) f32. Returns (N, 1) f32.

    Parameter layout (pre-transposed vs. torch): w1: (D, 10), b1: (10,),
    w2: (10, 1), b2: (1,), with D = C*H*W.
    """
    N = x_nchw.shape[0]
    D = x_nchw.shape[1] * x_nchw.shape[2] * x_nchw.shape[3]
    x_flat = x_nchw.reshape(N, D).astype(jnp.float32)   # nn.Flatten(start_dim=1), row-major NCHW

    # --- host-side weight prep: zero-pad hidden dim 10 -> 128 (lane-dense) ---
    h_in = w1.shape[1]                                   # 10
    w1_p = jnp.zeros((D, HID_PAD), jnp.float32).at[:, :h_in].set(w1.astype(jnp.float32))
    b1_p = jnp.zeros((1, HID_PAD), jnp.float32).at[:, :h_in].set(b1.astype(jnp.float32))
    w2_p = jnp.zeros((1, HID_PAD), jnp.float32).at[:, :h_in].set(w2.astype(jnp.float32)[:, 0])
    b2_p = b2.reshape(1, 1).astype(jnp.float32)

    # --- batch tiling: biggest tile that keeps the double-buffered x stream under ~8 MiB ---
    max_tile = max(8, ((8 * 1024 * 1024) // (2 * D * 4)) // 8 * 8)
    tile_n = min(1024, max_tile, _round_up(N, 8))
    n_pad = _round_up(N, tile_n)
    if n_pad != N:
        x_flat = jnp.pad(x_flat, ((0, n_pad - N), (0, 0)))
    num_tiles = n_pad // tile_n

    cost = pl.CostEstimate(
        flops=2 * n_pad * D * HID_PAD + 4 * n_pad * HID_PAD,
        transcendentals=0,
        bytes_accessed=n_pad * D * 4 + D * HID_PAD * 4 + n_pad * HID_PAD * 4,
    )

    out_slab = pl.pallas_call(
        _mlp_kernel,
        out_shape=jax.ShapeDtypeStruct((n_pad, HID_PAD), jnp.float32),
        grid=(num_tiles,),
        in_specs=[
            pl.BlockSpec((tile_n, D), lambda i: (i, 0)),        # x: streamed per batch tile
            pl.BlockSpec((D, HID_PAD), lambda i: (0, 0)),       # w1: resident across the grid
            pl.BlockSpec((1, HID_PAD), lambda i: (0, 0)),       # b1: resident
            pl.BlockSpec((1, HID_PAD), lambda i: (0, 0)),       # w2 row: resident
            pl.BlockSpec((1, 1), lambda i: (0, 0)),             # b2: resident
        ],
        out_specs=pl.BlockSpec((tile_n, HID_PAD), lambda i: (i, 0)),
        compiler_params=pltpu.CompilerParams(
            dimension_semantics=("parallel",),
            vmem_limit_bytes=32 * 1024 * 1024,
        ),
        cost_estimate=cost,
    )(x_flat, w1_p, b1_p, w2_p, b2_p)

    # Every lane holds the same value; take column 0 and drop batch padding.
    return out_slab[:N, 0:1]


if __name__ == "__main__":
    # Small shapes consistent with the module: batch=2, C=4, H=16, W=16.
    N, C, H, W = 2, 4, 16, 16
    D = C * H * W

    key = jax.random.PRNGKey(0)
    kx, kw1, kb1, kw2, kb2 = jax.random.split(key, 5)

    x = jax.random.normal(kx, (N, C, H, W), dtype=jnp.float32)

    # Deterministic parameter init (torch.nn.Linear-like uniform scale), (in, out) layout.
    s1 = 1.0 / (D ** 0.5)
    w1 = jax.random.uniform(kw1, (D, 10), jnp.float32, -s1, s1)
    b1 = jax.random.uniform(kb1, (10,), jnp.float32, -s1, s1)
    s2 = 1.0 / (10 ** 0.5)
    w2 = jax.random.uniform(kw2, (10, 1), jnp.float32, -s2, s2)
    b2 = jax.random.uniform(kb2, (1,), jnp.float32, -s2, s2)

    out = flatten_model_forward(x, w1, b1, w2, b2)
    out = jax.block_until_ready(out)

    # Reference check in plain JAX (same math as the PyTorch forward).
    ref = jnp.maximum(x.reshape(N, D) @ w1 + b1, 0.0) @ w2 + b2
    assert out.shape == (N, 1)
    assert jnp.allclose(out, ref, atol=1e-5, rtol=1e-5)

    print("KERNEL_OK")
</pallas_src>

<mosaic_0001>
module attributes {stable_mosaic.version = 11 : i64} {
  func.func @_mlp_kernel(%arg0: i32, %arg1: memref<8x1024xf32, #tpu.memory_space<vmem>>, %arg2: memref<1024x128xf32, #tpu.memory_space<vmem>>, %arg3: memref<1x128xf32, #tpu.memory_space<vmem>>, %arg4: memref<1x128xf32, #tpu.memory_space<vmem>>, %arg5: memref<1x1xf32, #tpu.memory_space<vmem>>, %arg6: memref<8x128xf32, #tpu.memory_space<vmem>>) attributes {dimension_semantics = [#tpu.dimension_semantics<parallel>], iteration_bounds = array<i64: 1>, scalar_prefetch = 0 : i64, scratch_operands = 0 : i64, tpu.core_type = #tpu.core_type<tc>, window_params = [{transform_indices = @transform_0, window_bounds = array<i64: 8, 1024>}, {pipeline_mode = #tpu.pipeline_mode<synchronous>, transform_indices = @transform_1, window_bounds = array<i64: 1024, 128>}, {pipeline_mode = #tpu.pipeline_mode<synchronous>, transform_indices = @transform_2, window_bounds = array<i64: 1, 128>}, {pipeline_mode = #tpu.pipeline_mode<synchronous>, transform_indices = @transform_3, window_bounds = array<i64: 1, 128>}, {pipeline_mode = #tpu.pipeline_mode<synchronous>, transform_indices = @transform_4, window_bounds = array<i64: 1, 1>}, {transform_indices = @transform_5, window_bounds = array<i64: 8, 128>}]} {
    %c0 = arith.constant 0 : index
    %c0_0 = arith.constant 0 : index
    %0 = vector.load %arg1[%c0, %c0_0] : memref<8x1024xf32, #tpu.memory_space<vmem>>, vector<8x1024xf32>
    %c0_1 = arith.constant 0 : index
    %c0_2 = arith.constant 0 : index
    %1 = vector.load %arg2[%c0_1, %c0_2] : memref<1024x128xf32, #tpu.memory_space<vmem>>, vector<1024x128xf32>
    %cst = arith.constant dense<0.000000e+00> : vector<8x128xf32>
    %2 = tpu.matmul %0, %1, %cst {dimension_numbers = #tpu.dot_dimension_numbers<[1], [0], [0], [1], [0, 0, 1, 1], [], []>} : vector<8x1024xf32>, vector<1024x128xf32>, vector<8x128xf32> -> vector<8x128xf32>
    %c0_3 = arith.constant 0 : index
    %c0_4 = arith.constant 0 : index
    %3 = vector.load %arg3[%c0_3, %c0_4] : memref<1x128xf32, #tpu.memory_space<vmem>>, vector<1x128xf32>
    %4 = vector.broadcast %3 : vector<1x128xf32> to vector<8x128xf32>
    %5 = arith.addf %2, %4 : vector<8x128xf32>
    %cst_5 = arith.constant 0.000000e+00 : f32
    %6 = vector.broadcast %cst_5 : f32 to vector<8x128xf32>
    %7 = arith.maximumf %5, %6 : vector<8x128xf32>
    %c0_6 = arith.constant 0 : index
    %c0_7 = arith.constant 0 : index
    %8 = vector.load %arg4[%c0_6, %c0_7] : memref<1x128xf32, #tpu.memory_space<vmem>>, vector<1x128xf32>
    %9 = vector.broadcast %8 : vector<1x128xf32> to vector<8x128xf32>
    %10 = arith.mulf %7, %9 : vector<8x128xf32>
    %cst_8 = arith.constant dense<0.000000e+00> : vector<8xf32>
    %11 = vector.multi_reduction <add>, %10, %cst_8 [1] : vector<8x128xf32> to vector<8xf32>
    %12 = vector.shape_cast %11 : vector<8xf32> to vector<8x1xf32>
    %c0_9 = arith.constant 0 : index
    %c0_10 = arith.constant 0 : index
    %13 = vector.load %arg5[%c0_9, %c0_10] : memref<1x1xf32, #tpu.memory_space<vmem>>, vector<1x1xf32>
    %14 = vector.broadcast %13 : vector<1x1xf32> to vector<8x1xf32>
    %15 = arith.addf %12, %14 : vector<8x1xf32>
    %16 = vector.shape_cast %15 : vector<8x1xf32> to vector<8x1xf32>
    %17 = vector.broadcast %16 : vector<8x1xf32> to vector<8x128xf32>
    %c0_11 = arith.constant 0 : index
    %c0_12 = arith.constant 0 : index
    %18 = vector.load %arg6[%c0_11, %c0_12] : memref<8x128xf32, #tpu.memory_space<vmem>>, vector<8x128xf32>
    tpu.vector_store %arg6[%c0_11, %c0_12], %17 {strides = array<i32>} : memref<8x128xf32, #tpu.memory_space<vmem>>, vector<8x128xf32>,
    return
  }
  func.func @transform_0(%arg0: i32) -> (i32, i32) {
    %c0_i32 = arith.constant 0 : i32
    %c0_i32_0 = arith.constant 0 : i32
    return %arg0, %c0_i32 : i32, i32
  }
  func.func @transform_1(%arg0: i32) -> (i32, i32) {
    %c0_i32 = arith.constant 0 : i32
    %c0_i32_0 = arith.constant 0 : i32
    %c0_i32_1 = arith.constant 0 : i32
    return %c0_i32, %c0_i32_0 : i32, i32
  }
  func.func @transform_2(%arg0: i32) -> (i32, i32) {
    %c0_i32 = arith.constant 0 : i32
    %c0_i32_0 = arith.constant 0 : i32
    %c0_i32_1 = arith.constant 0 : i32
    return %c0_i32, %c0_i32_0 : i32, i32
  }
  func.func @transform_3(%arg0: i32) -> (i32, i32) {
    %c0_i32 = arith.constant 0 : i32
    %c0_i32_0 = arith.constant 0 : i32
    %c0_i32_1 = arith.constant 0 : i32
    return %c0_i32, %c0_i32_0 : i32, i32
  }
  func.func @transform_4(%arg0: i32) -> (i32, i32) {
    %c0_i32 = arith.constant 0 : i32
    %c0_i32_0 = arith.constant 0 : i32
    %c0_i32_1 = arith.constant 0 : i32
    return %c0_i32, %c0_i32_0 : i32, i32
  }
  func.func @transform_5(%arg0: i32) -> (i32, i32) {
    %c0_i32 = arith.constant 0 : i32
    %c0_i32_0 = arith.constant 0 : i32
    return %arg0, %c0_i32 : i32, i32
  }
}

</mosaic_0001>

<llo_original>
// kernel: tpu_custom_call.1
$region0: #{tpu_custom_call.1}
  #allocation0 [shape = 'u32[]', space=smem, size = 0x4, offset = 0x4, fixed_abs, tag = 'smem constant byte address 0x4 - core index']
  #allocation1 [shape = 'u32[72,128]{1,0:T(1,128)}', space=vmem, size = 0x9000, scoped, tag = 'internal scratch']
  #allocation2 [shape = 'f32[1,1]{1,0:T(1,128)S(1)}', space=vmem, size = 0x200, scoped, tag = 'scoped memory for tpu_custom_call.1']
  %s0 = inlined_call_operand.hbm [shape: f32[8,1024], index: 0, kind: input, shape index: {}]
  %s1 = inlined_call_operand.hbm [shape: f32[1024,128], index: 1, kind: input, shape index: {}]
  %s2 = inlined_call_operand.vmem [shape: f32[1,128], index: 2, kind: input, shape index: {}]
  %s3 = inlined_call_operand.vmem [shape: f32[1,128], index: 3, kind: input, shape index: {}]
  %s4 = inlined_call_operand.<no memory space> [shape: f32[1,1], index: 4, kind: input, shape index: {}]
  %s5 = inlined_call_operand.hbm [shape: f32[8,128], index: 5, kind: output, shape index: {}]
  %s6 = sld [smem:[#allocation0]]
  $region38: #{tpu_custom_call.1} parent=0
    _
  %s8 = ssub.s32 1, %s6
  %s9 = scalar_select 0, %s8, %s6
  %v10 = vstv %s4
  %11 = vst [vmem:[#allocation2] sm:$0x1] %v10
  $region1: #{tpu_custom_call.1} parent=0
    #allocation3 [shape = 'u8[32768]{0}', space=vmem, size = 0x8000, scoped, tag = 'input window, operand 0, single buffered']
    #allocation4 [shape = 's32[1]{0}', space=sflag, size = 0x4, scoped, tag = 'scoped memory for tpu_custom_call.1']
    #allocation5 [shape = 's32[1]{0}', space=sflag, size = 0x4, scoped, tag = 'scoped memory for tpu_custom_call.1']
    #allocation6 [shape = 'u8[524288]{0}', space=vmem, size = 0x80000, scoped, tag = 'input window, operand 1, single buffered']
    #allocation7 [shape = 's32[1]{0}', space=sflag, size = 0x4, scoped, tag = 'scoped memory for tpu_custom_call.1']
    #allocation8 [shape = 'u8[4096]{0}', space=vmem, size = 0x1000, scoped, tag = 'output window, operand 0, single buffered']
    %12 = vsyncpa [#allocation4], 0
    %13 = vsyncpa [#allocation7], 0
    %14 = vsyncpa [#allocation5], 0
    // Predicated region
    $region2: #{tpu_custom_call.1} parent=1 // pred_check
      _
    $region3: #{tpu_custom_call.1} parent=1 // pred_check_branch
      %16 = sbr.rel (0) target = $region5
    $region4: #{tpu_custom_call.1} parent=1 // pred_region
      %18 = vsyncadd [#allocation4], 0
      %s20 = sshll.u32 %s0, 4
      %s21 = int_to_ptr.hbm [resolvable:$true] %s20
      %s22 = sshll.u32 [#allocation3], 4
      %s23 = int_to_ptr.vmem [resolvable:$true] %s22
      %25 = dma.hbm_to_vmem [thread:$0]  %s21, 1024, %s23, [#allocation4]
    $region5: #{tpu_custom_call.1} parent=1 // pred_fallthru
      _
    // Predicated region
    $region6: #{tpu_custom_call.1} parent=1 // pred_check
      _
    $region7: #{tpu_custom_call.1} parent=1 // pred_check_branch
      %27 = sbr.rel (0) target = $region9
    $region8: #{tpu_custom_call.1} parent=1 // pred_region
      %29 = vsyncadd [#allocation7], 0
      %s30 = sshll.u32 %s1, 4
      %s31 = int_to_ptr.hbm [resolvable:$true] %s30
      %s32 = sshll.u32 [#allocation6], 4
      %s33 = int_to_ptr.vmem [resolvable:$true] %s32
      %38 = dma.hbm_to_vmem [thread:$0]  %s31, 16384, %s33, [#allocation7], 128, 128, 8
    $region9: #{tpu_custom_call.1} parent=1 // pred_fallthru
      _
    // Predicated region
    $region10: #{tpu_custom_call.1} parent=1 // pred_check
      _
    $region11: #{tpu_custom_call.1} parent=1 // pred_check_branch
      %40 = sbr.rel (0) target = $region13
    $region12: #{tpu_custom_call.1} parent=1 // pred_region
      _
    $region13: #{tpu_custom_call.1} parent=1 // pred_fallthru
      _
    // Predicated region
    $region14: #{tpu_custom_call.1} parent=1 // pred_check
      _
    $region15: #{tpu_custom_call.1} parent=1 // pred_check_branch
      %42 = sbr.rel (0) target = $region17
    $region16: #{tpu_custom_call.1} parent=1 // pred_region
      _
    $region17: #{tpu_custom_call.1} parent=1 // pred_fallthru
      _
    // Predicated region
    $region18: #{tpu_custom_call.1} parent=1 // pred_check
      _
    $region19: #{tpu_custom_call.1} parent=1 // pred_check_branch
      %44 = sbr.rel (0) target = $region21
    $region20: #{tpu_custom_call.1} parent=1 // pred_region
      _
    $region21: #{tpu_custom_call.1} parent=1 // pred_fallthru
      _
    // Predicated region
    $region22: #{tpu_custom_call.1} parent=1 // pred_check
      _
    $region23: #{tpu_custom_call.1} parent=1 // pred_check_branch
      %46 = sbr.rel (0) target = $region25
    $region24: #{tpu_custom_call.1} parent=1 // pred_region
      %48 = dma.done [#allocation4], 1024
    $region25: #{tpu_custom_call.1} parent=1 // pred_fallthru
      _
    // Predicated region
    $region26: #{tpu_custom_call.1} parent=1 // pred_check
      _
    $region27: #{tpu_custom_call.1} parent=1 // pred_check_branch
      %50 = sbr.rel (0) target = $region29
    $region28: #{tpu_custom_call.1} parent=1 // pred_region
      %52 = dma.done [#allocation7], 16384
    $region29: #{tpu_custom_call.1} parent=1 // pred_fallthru
      _
    %v53 = vld [vmem:[#allocation3] sm:$0xff]
    %v54 = vld [vmem:[#allocation3 + $0x8] sm:$0xff]
    %v55 = vld [vmem:[#allocation3 + $0x10] sm:$0xff]
    %v56 = vld [vmem:[#allocation3 + $0x18] sm:$0xff]
    %v57 = vld [vmem:[#allocation3 + $0x20] sm:$0xff]
    %v58 = vld [vmem:[#allocation3 + $0x28] sm:$0xff]
    %v59 = vld [vmem:[#allocation3 + $0x30] sm:$0xff]
    %v60 = vld [vmem:[#allocation3 + $0x38] sm:$0xff]
    %v61 = vld [vmem:[#allocation6] sm:$0xff]
    %v62 = vld [vmem:[#allocation6 + $0x8] sm:$0xff]
    %v63 = vld [vmem:[#allocation6 + $0x10] sm:$0xff]
    %v64 = vld [vmem:[#allocation6 + $0x18] sm:$0xff]
    %v65 = vld [vmem:[#allocation6 + $0x20] sm:$0xff]
    %v66 = vld [vmem:[#allocation6 + $0x28] sm:$0xff]
    %v67 = vld [vmem:[#allocation6 + $0x30] sm:$0xff]
    %v68 = vld [vmem:[#allocation6 + $0x38] sm:$0xff]
    %v69 = vld [vmem:[#allocation6 + $0x40] sm:$0xff]
    %v70 = vld [vmem:[#allocation6 + $0x48] sm:$0xff]
    %v71 = vld [vmem:[#allocation6 + $0x50] sm:$0xff]
    %v72 = vld [vmem:[#allocation6 + $0x58] sm:$0xff]
    %v73 = vld [vmem:[#allocation6 + $0x60] sm:$0xff]
    %v74 = vld [vmem:[#allocation6 + $0x68] sm:$0xff]
    %v75 = vld [vmem:[#allocation6 + $0x70] sm:$0xff]
    %v76 = vld [vmem:[#allocation6 + $0x78] sm:$0xff]
    %v77 = vld [vmem:[#allocation6 + $0x80] sm:$0xff]
    %v78 = vld [vmem:[#allocation6 + $0x88] sm:$0xff]
    %v79 = vld [vmem:[#allocation6 + $0x90] sm:$0xff]
    %v80 = vld [vmem:[#allocation6 + $0x98] sm:$0xff]
    %v81 = vld [vmem:[#allocation6 + $0xa0] sm:$0xff]
    %v82 = vld [vmem:[#allocation6 + $0xa8] sm:$0xff]
    %v83 = vld [vmem:[#allocation6 + $0xb0] sm:$0xff]
    %v84 = vld [vmem:[#allocation6 + $0xb8] sm:$0xff]
    %v85 = vld [vmem:[#allocation6 + $0xc0] sm:$0xff]
    %v86 = vld [vmem:[#allocation6 + $0xc8] sm:$0xff]
    %v87 = vld [vmem:[#allocation6 + $0xd0] sm:$0xff]
    %v88 = vld [vmem:[#allocation6 + $0xd8] sm:$0xff]
    %v89 = vld [vmem:[#allocation6 + $0xe0] sm:$0xff]
    %v90 = vld [vmem:[#allocation6 + $0xe8] sm:$0xff]
    %v91 = vld [vmem:[#allocation6 + $0xf0] sm:$0xff]
    %v92 = vld [vmem:[#allocation6 + $0xf8] sm:$0xff]
    %v93 = vld [vmem:[#allocation6 + $0x100] sm:$0xff]
    %v94 = vld [vmem:[#allocation6 + $0x108] sm:$0xff]
    %v95 = vld [vmem:[#allocation6 + $0x110] sm:$0xff]
    %v96 = vld [vmem:[#allocation6 + $0x118] sm:$0xff]
    %v97 = vld [vmem:[#allocation6 + $0x120] sm:$0xff]
    %v98 = vld [vmem:[#allocation6 + $0x128] sm:$0xff]
    %v99 = vld [vmem:[#allocation6 + $0x130] sm:$0xff]
    %v100 = vld [vmem:[#allocation6 + $0x138] sm:$0xff]
    %v101 = vld [vmem:[#allocation6 + $0x140] sm:$0xff]
    %v102 = vld [vmem:[#allocation6 + $0x148] sm:$0xff]
    %v103 = vld [vmem:[#allocation6 + $0x150] sm:$0xff]
    %v104 = vld [vmem:[#allocation6 + $0x158] sm:$0xff]
    %v105 = vld [vmem:[#allocation6 + $0x160] sm:$0xff]
    %v106 = vld [vmem:[#allocation6 + $0x168] sm:$0xff]
    %v107 = vld [vmem:[#allocation6 + $0x170] sm:$0xff]
    %v108 = vld [vmem:[#allocation6 + $0x178] sm:$0xff]
    %v109 = vld [vmem:[#allocation6 + $0x180] sm:$0xff]
    %v110 = vld [vmem:[#allocation6 + $0x188] sm:$0xff]
    %v111 = vld [vmem:[#allocation6 + $0x190] sm:$0xff]
    %v112 = vld [vmem:[#allocation6 + $0x198] sm:$0xff]
    %v113 = vld [vmem:[#allocation6 + $0x1a0] sm:$0xff]
    %v114 = vld [vmem:[#allocation6 + $0x1a8] sm:$0xff]
    %v115 = vld [vmem:[#allocation6 + $0x1b0] sm:$0xff]
    %v116 = vld [vmem:[#allocation6 + $0x1b8] sm:$0xff]
    %v117 = vld [vmem:[#allocation6 + $0x1c0] sm:$0xff]
    %v118 = vld [vmem:[#allocation6 + $0x1c8] sm:$0xff]
    %v119 = vld [vmem:[#allocation6 + $0x1d0] sm:$0xff]
    %v120 = vld [vmem:[#allocation6 + $0x1d8] sm:$0xff]
    %v121 = vld [vmem:[#allocation6 + $0x1e0] sm:$0xff]
    %v122 = vld [vmem:[#allocation6 + $0x1e8] sm:$0xff]
    %v123 = vld [vmem:[#allocation6 + $0x1f0] sm:$0xff]
    %v124 = vld [vmem:[#allocation6 + $0x1f8] sm:$0xff]
    %v125 = vld [vmem:[#allocation6 + $0x200] sm:$0xff]
    %v126 = vld [vmem:[#allocation6 + $0x208] sm:$0xff]
    %v127 = vld [vmem:[#allocation6 + $0x210] sm:$0xff]
    %v128 = vld [vmem:[#allocation6 + $0x218] sm:$0xff]
    %v129 = vld [vmem:[#allocation6 + $0x220] sm:$0xff]
    %v130 = vld [vmem:[#allocation6 + $0x228] sm:$0xff]
    %v131 = vld [vmem:[#allocation6 + $0x230] sm:$0xff]
    %v132 = vld [vmem:[#allocation6 + $0x238] sm:$0xff]
    %v133 = vld [vmem:[#allocation6 + $0x240] sm:$0xff]
    %v134 = vld [vmem:[#allocation6 + $0x248] sm:$0xff]
    %v135 = vld [vmem:[#allocation6 + $0x250] sm:$0xff]
    %v136 = vld [vmem:[#allocation6 + $0x258] sm:$0xff]
    %v137 = vld [vmem:[#allocation6 + $0x260] sm:$0xff]
    %v138 = vld [vmem:[#allocation6 + $0x268] sm:$0xff]
    %v139 = vld [vmem:[#allocation6 + $0x270] sm:$0xff]
    %v140 = vld [vmem:[#allocation6 + $0x278] sm:$0xff]
    %v141 = vld [vmem:[#allocation6 + $0x280] sm:$0xff]
    %v142 = vld [vmem:[#allocation6 + $0x288] sm:$0xff]
    %v143 = vld [vmem:[#allocation6 + $0x290] sm:$0xff]
    %v144 = vld [vmem:[#allocation6 + $0x298] sm:$0xff]
    %v145 = vld [vmem:[#allocation6 + $0x2a0] sm:$0xff]
    %v146 = vld [vmem:[#allocation6 + $0x2a8] sm:$0xff]
    %v147 = vld [vmem:[#allocation6 + $0x2b0] sm:$0xff]
    %v148 = vld [vmem:[#allocation6 + $0x2b8] sm:$0xff]
    %v149 = vld [vmem:[#allocation6 + $0x2c0] sm:$0xff]
    %v150 = vld [vmem:[#allocation6 + $0x2c8] sm:$0xff]
    %v151 = vld [vmem:[#allocation6 + $0x2d0] sm:$0xff]
    %v152 = vld [vmem:[#allocation6 + $0x2d8] sm:$0xff]
    %v153 = vld [vmem:[#allocation6 + $0x2e0] sm:$0xff]
    %v154 = vld [vmem:[#allocation6 + $0x2e8] sm:$0xff]
    %v155 = vld [vmem:[#allocation6 + $0x2f0] sm:$0xff]
    %v156 = vld [vmem:[#allocation6 + $0x2f8] sm:$0xff]
    %v157 = vld [vmem:[#allocation6 + $0x300] sm:$0xff]
    %v158 = vld [vmem:[#allocation6 + $0x308] sm:$0xff]
    %v159 = vld [vmem:[#allocation6 + $0x310] sm:$0xff]
    %v160 = vld [vmem:[#allocation6 + $0x318] sm:$0xff]
    %v161 = vld [vmem:[#allocation6 + $0x320] sm:$0xff]
    %v162 = vld [vmem:[#allocation6 + $0x328] sm:$0xff]
    %v163 = vld [vmem:[#allocation6 + $0x330] sm:$0xff]
    %v164 = vld [vmem:[#allocation6 + $0x338] sm:$0xff]
    %v165 = vld [vmem:[#allocation6 + $0x340] sm:$0xff]
    %v166 = vld [vmem:[#allocation6 + $0x348] sm:$0xff]
    %v167 = vld [vmem:[#allocation6 + $0x350] sm:$0xff]
    %v168 = vld [vmem:[#allocation6 + $0x358] sm:$0xff]
    %v169 = vld [vmem:[#allocation6 + $0x360] sm:$0xff]
    %v170 = vld [vmem:[#allocation6 + $0x368] sm:$0xff]
    %v171 = vld [vmem:[#allocation6 + $0x370] sm:$0xff]
    %v172 = vld [vmem:[#allocation6 + $0x378] sm:$0xff]
    %v173 = vld [vmem:[#allocation6 + $0x380] sm:$0xff]
    %v174 = vld [vmem:[#allocation6 + $0x388] sm:$0xff]
    %v175 = vld [vmem:[#allocation6 + $0x390] sm:$0xff]
    %v176 = vld [vmem:[#allocation6 + $0x398] sm:$0xff]
    %v177 = vld [vmem:[#allocation6 + $0x3a0] sm:$0xff]
    %v178 = vld [vmem:[#allocation6 + $0x3a8] sm:$0xff]
    %v179 = vld [vmem:[#allocation6 + $0x3b0] sm:$0xff]
    %v180 = vld [vmem:[#allocation6 + $0x3b8] sm:$0xff]
    %v181 = vld [vmem:[#allocation6 + $0x3c0] sm:$0xff]
    %v182 = vld [vmem:[#allocation6 + $0x3c8] sm:$0xff]
    %v183 = vld [vmem:[#allocation6 + $0x3d0] sm:$0xff]
    %v184 = vld [vmem:[#allocation6 + $0x3d8] sm:$0xff]
    %v185 = vld [vmem:[#allocation6 + $0x3e0] sm:$0xff]
    %v186 = vld [vmem:[#allocation6 + $0x3e8] sm:$0xff]
    %v187 = vld [vmem:[#allocation6 + $0x3f0] sm:$0xff]
    %v188 = vld [vmem:[#allocation6 + $0x3f8] sm:$0xff]
    %v189 = vld [vmem:[%s2] sm:$0x1]
    %v191 = vperm.slane %v189, 0
    %193 = vmatpush.msra.mxu0 %v76
    %194 = vmatpush.msra.mxu0 %v75
    %195 = vmatpush.msra.mxu0 %v74
    %196 = vmatpush.msra.mxu0 %v73
    %197 = vmatpush.msra.mxu0 %v72
    %198 = vmatpush.msra.mxu0 %v71
    %199 = vmatpush.msra.mxu0 %v70
    %200 = vmatpush.msra.mxu0 %v69
    %201 = vmatpush.msra.mxu0 %v68
    %202 = vmatpush.msra.mxu0 %v67
    %203 = vmatpush.msra.mxu0 %v66
    %204 = vmatpush.msra.mxu0 %v65
    %205 = vmatpush.msra.mxu0 %v64
    %206 = vmatpush.msra.mxu0 %v63
    %207 = vmatpush.msra.mxu0 %v62
    %208 = vmatpush.msra.mxu0 %v61
    %209 = vmatmul.f32.gmra.mxu0 %v53
    %v210 = vpop.f32.mrf.mxu0
    %v211 = vadd.f32 %v191, %v210
    %212 = vdwg.mxu0
    %213 = vmatpush.msra.mxu0 %v92
    %214 = vmatpush.msra.mxu0 %v91
    %215 = vmatpush.msra.mxu0 %v90
    %216 = vmatpush.msra.mxu0 %v89
    %217 = vmatpush.msra.mxu0 %v88
    %218 = vmatpush.msra.mxu0 %v87
    %219 = vmatpush.msra.mxu0 %v86
    %220 = vmatpush.msra.mxu0 %v85
    %221 = vmatpush.msra.mxu0 %v84
    %222 = vmatpush.msra.mxu0 %v83
    %223 = vmatpush.msra.mxu0 %v82
    %224 = vmatpush.msra.mxu0 %v81
    %225 = vmatpush.msra.mxu0 %v80
    %226 = vmatpush.msra.mxu0 %v79
    %227 = vmatpush.msra.mxu0 %v78
    %228 = vmatpush.msra.mxu0 %v77
    %229 = vmatmul.f32.gmra.mxu0 %v54
    %v230 = vpop.f32.mrf.mxu0
    %v231 = vadd.f32 %v211, %v230
    %232 = vdwg.mxu0
    %233 = vmatpush.msra.mxu0 %v108
    %234 = vmatpush.msra.mxu0 %v107
    %235 = vmatpush.msra.mxu0 %v106
    %236 = vmatpush.msra.mxu0 %v105
    %237 = vmatpush.msra.mxu0 %v104
    %238 = vmatpush.msra.mxu0 %v103
    %239 = vmatpush.msra.mxu0 %v102
    %240 = vmatpush.msra.mxu0 %v101
    %241 = vmatpush.msra.mxu0 %v100
    %242 = vmatpush.msra.mxu0 %v99
    %243 = vmatpush.msra.mxu0 %v98
    %244 = vmatpush.msra.mxu0 %v97
    %245 = vmatpush.msra.mxu0 %v96
    %246 = vmatpush.msra.mxu0 %v95
    %247 = vmatpush.msra.mxu0 %v94
    %248 = vmatpush.msra.mxu0 %v93
    %249 = vmatmul.f32.gmra.mxu0 %v55
    %v250 = vpop.f32.mrf.mxu0
    %v251 = vadd.f32 %v231, %v250
    %252 = vdwg.mxu0
    %253 = vmatpush.msra.mxu0 %v124
    %254 = vmatpush.msra.mxu0 %v123
    %255 = vmatpush.msra.mxu0 %v122
    %256 = vmatpush.msra.mxu0 %v121
    %257 = vmatpush.msra.mxu0 %v120
    %258 = vmatpush.msra.mxu0 %v119
    %259 = vmatpush.msra.mxu0 %v118
    %260 = vmatpush.msra.mxu0 %v117
    %261 = vmatpush.msra.mxu0 %v116
    %262 = vmatpush.msra.mxu0 %v115
    %263 = vmatpush.msra.mxu0 %v114
    %264 = vmatpush.msra.mxu0 %v113
    %265 = vmatpush.msra.mxu0 %v112
    %266 = vmatpush.msra.mxu0 %v111
    %267 = vmatpush.msra.mxu0 %v110
    %268 = vmatpush.msra.mxu0 %v109
    %269 = vmatmul.f32.gmra.mxu0 %v56
    %v270 = vpop.f32.mrf.mxu0
    %v271 = vadd.f32 %v251, %v270
    %272 = vdwg.mxu0
    %273 = vmatpush.msra.mxu0 %v140
    %274 = vmatpush.msra.mxu0 %v139
    %275 = vmatpush.msra.mxu0 %v138
    %276 = vmatpush.msra.mxu0 %v137
    %277 = vmatpush.msra.mxu0 %v136
    %278 = vmatpush.msra.mxu0 %v135
    %279 = vmatpush.msra.mxu0 %v134
    %280 = vmatpush.msra.mxu0 %v133
    %281 = vmatpush.msra.mxu0 %v132
    %282 = vmatpush.msra.mxu0 %v131
    %283 = vmatpush.msra.mxu0 %v130
    %284 = vmatpush.msra.mxu0 %v129
    %285 = vmatpush.msra.mxu0 %v128
    %286 = vmatpush.msra.mxu0 %v127
    %287 = vmatpush.msra.mxu0 %v126
    %288 = vmatpush.msra.mxu0 %v125
    %289 = vmatmul.f32.gmra.mxu0 %v57
    %v290 = vpop.f32.mrf.mxu0
    %v291 = vadd.f32 %v271, %v290
    %292 = vdwg.mxu0
    %293 = vmatpush.msra.mxu0 %v156
    %294 = vmatpush.msra.mxu0 %v155
    %295 = vmatpush.msra.mxu0 %v154
    %296 = vmatpush.msra.mxu0 %v153
    %297 = vmatpush.msra.mxu0 %v152
    %298 = vmatpush.msra.mxu0 %v151
    %299 = vmatpush.msra.mxu0 %v150
    %300 = vmatpush.msra.mxu0 %v149
    %301 = vmatpush.msra.mxu0 %v148
    %302 = vmatpush.msra.mxu0 %v147
    %303 = vmatpush.msra.mxu0 %v146
    %304 = vmatpush.msra.mxu0 %v145
    %305 = vmatpush.msra.mxu0 %v144
    %306 = vmatpush.msra.mxu0 %v143
    %307 = vmatpush.msra.mxu0 %v142
    %308 = vmatpush.msra.mxu0 %v141
    %309 = vmatmul.f32.gmra.mxu0 %v58
    %v310 = vpop.f32.mrf.mxu0
    %v311 = vadd.f32 %v291, %v310
    %312 = vdwg.mxu0
    %313 = vmatpush.msra.mxu0 %v172
    %314 = vmatpush.msra.mxu0 %v171
    %315 = vmatpush.msra.mxu0 %v170
    %316 = vmatpush.msra.mxu0 %v169
    %317 = vmatpush.msra.mxu0 %v168
    %318 = vmatpush.msra.mxu0 %v167
    %319 = vmatpush.msra.mxu0 %v166
    %320 = vmatpush.msra.mxu0 %v165
    %321 = vmatpush.msra.mxu0 %v164
    %322 = vmatpush.msra.mxu0 %v163
    %323 = vmatpush.msra.mxu0 %v162
    %324 = vmatpush.msra.mxu0 %v161
    %325 = vmatpush.msra.mxu0 %v160
    %326 = vmatpush.msra.mxu0 %v159
    %327 = vmatpush.msra.mxu0 %v158
    %328 = vmatpush.msra.mxu0 %v157
    %329 = vmatmul.f32.gmra.mxu0 %v59
    %v330 = vpop.f32.mrf.mxu0
    %v331 = vadd.f32 %v311, %v330
    %332 = vdwg.mxu0
    %333 = vmatpush.msra.mxu0 %v188
    %334 = vmatpush.msra.mxu0 %v187
    %335 = vmatpush.msra.mxu0 %v186
    %336 = vmatpush.msra.mxu0 %v185
    %337 = vmatpush.msra.mxu0 %v184
    %338 = vmatpush.msra.mxu0 %v183
    %339 = vmatpush.msra.mxu0 %v182
    %340 = vmatpush.msra.mxu0 %v181
    %341 = vmatpush.msra.mxu0 %v180
    %342 = vmatpush.msra.mxu0 %v179
    %343 = vmatpush.msra.mxu0 %v178
    %344 = vmatpush.msra.mxu0 %v177
    %345 = vmatpush.msra.mxu0 %v176
    %346 = vmatpush.msra.mxu0 %v175
    %347 = vmatpush.msra.mxu0 %v174
    %348 = vmatpush.msra.mxu0 %v173
    %349 = vmatmul.f32.gmra.mxu0 %v60
    %v350 = vpop.f32.mrf.mxu0
    %v351 = vadd.f32 %v331, %v350
    %352 = vdwg.mxu0
    %v353 = vmax.f32 %v351, 0.0
    %v354 = vld [vmem:[%s3] sm:$0x1]
    %v356 = vperm.slane %v354, 0
    %v358 = vmul.f32 %v353, %v356
    %359 = vadd.xlane.f32.xlu0 %v358
    %v360 = vpop.xlane.xlu0 %359
    %v361 = vld [vmem:[#allocation2] sm:$0x1]
    %v363 = vperm.slane %v361, 0
    %v365 = vadd.f32 %v360, %v363
    %367 = vset.pattern.permute.xlu0 0
    %368 = vperm.xlu0 %367, %v365
    %v369 = vpop.permute.xlu0 %368
    %371 = vst [vmem:[#allocation8] sm:$0xff] %v369
    // Predicated region
    $region30: #{tpu_custom_call.1} parent=1 // pred_check
      _
    $region31: #{tpu_custom_call.1} parent=1 // pred_check_branch
      %373 = sbr.rel (0) target = $region33
    $region32: #{tpu_custom_call.1} parent=1 // pred_region
      %375 = vsyncadd [#allocation5], 0
      %s377 = sshll.u32 [#allocation8], 4
      %s378 = int_to_ptr.vmem [resolvable:$true] %s377
      %s379 = sshll.u32 %s5, 4
      %s380 = int_to_ptr.hbm [resolvable:$true] %s379
      %382 = dma.vmem_to_hbm [thread:$0]  %s378, 128, %s380, [#allocation5]
    $region33: #{tpu_custom_call.1} parent=1 // pred_fallthru
      _
    // Predicated region
    $region34: #{tpu_custom_call.1} parent=1 // pred_check
      _
    $region35: #{tpu_custom_call.1} parent=1 // pred_check_branch
      %384 = sbr.rel (0) target = $region37
    $region36: #{tpu_custom_call.1} parent=1 // pred_region
      %386 = dma.done [#allocation5], 128
    $region37: #{tpu_custom_call.1} parent=1 // pred_fallthru
      _
    %387 = vsyncpa [#allocation4], 1
    %388 = vsyncpa [#allocation7], 1
    %389 = vsyncpa [#allocation5], 1

</llo_original>
